<compile_context>
chip_gen: v5e
topology: v5e:2x2
jax: 0.10.0
libtpu: 0.0.40
codegen_flags: <defaults>
</compile_context>

<pallas_src>
import functools

import jax
import jax.numpy as jnp
import numpy as np
from jax.experimental import pallas as pl
from jax.experimental.pallas import tpu as pltpu


def _round_up(x, m):
    return ((x + m - 1) // m) * m


def _ffnn_kernel(idx_ref,    # VMEM (N, TB, 1) int32  ingredient ids, slot-major slab
                 len_ref,    # VMEM (TB, 1)    f32    true set lengths
                 tabw_ref,   # VMEM (Vp, Dp)          emb_table @ reduce_dim @ mlp[0] (folded)
                 br1_ref,    # VMEM (1, Dp)    f32    fused reduce_dim / mlp[0] bias
                 w2p_ref,    # VMEM (Dp, Dp)          fused mlp[2] @ predictor weight
                 b2p_ref,    # VMEM (1, Dp)    f32    mlp[2] bias pushed through predictor
                 bp_ref,     # VMEM (1, Dp)    f32    predictor bias
                 o_ref,      # VMEM (TB, Dp)   f32
                 *, fast: bool):
    n, tb, _ = idx_ref.shape
    vp, dp = tabw_ref.shape
    compute = tabw_ref.dtype

    # --- embedding gather + reduce_dim + mlp[0] in one MXU pass: exact one-hot @ tabW ---
    # One-hot is built directly in the MXU compute dtype (0/1 is exact in bf16).
    col = jax.lax.broadcasted_iota(jnp.int32, (n, tb, vp), 2)
    onehot = (col == idx_ref[...]).astype(compute)          # (N, TB, Vp)
    onehot = onehot.reshape(n * tb, vp)                     # merge leading dims, lane dim intact

    h = jnp.dot(onehot, tabw_ref[...],
                preferred_element_type=jnp.float32) + br1_ref[...]
    h = jnp.maximum(h, 0.0)                                 # (N*TB, Dp) f32, ReLU of mlp[0]

    # --- sum pool over the set axis: slot-major layout => slot k is a contiguous slab ---
    s = h[0:tb]
    for k in range(1, n):                                   # static unroll, N-1 vector adds
        s = s + h[k * tb:(k + 1) * tb]                      # (TB, Dp) f32

    # --- length normalization (reference divides the raw sum by sq_lengths) ---
    lens = len_ref[...]                                     # (TB, 1) f32
    inv_len = pl.reciprocal(lens, approx=True) if fast else 1.0 / lens

    # --- mlp[2] hoisted past the linear pool, fused with the predictor ---
    # sum_i(h_i@w2 + b2) over all N slots (incl. padded) = (sum_i h_i)@w2 + N*b2
    y = jnp.dot((s * inv_len).astype(compute), w2p_ref[...],
                preferred_element_type=jnp.float32)
    y = y + (n * inv_len) * b2p_ref[...] + bp_ref[...]
    o_ref[...] = y.astype(o_ref.dtype)


def ffnn_set_transformer_forward(x_idx, sq_lengths, params, *, tb=256, use_bf16=False):
    """x_idx: [B, N] int32 ingredient ids, sq_lengths: [B] true lengths."""
    emb_table, wr, br, w1, b1, w2, b2, wp, bp = params
    B, N = x_idx.shape
    V, _ = emb_table.shape
    D = wr.shape[1]
    if V > 512:
        # TODO(synk): replace the in-kernel one-hot gather with a manual DMA row gather
        # (memory_space=pl.ANY table + make_async_copy / scalar-prefetched ids) for big vocabs.
        raise NotImplementedError("one-hot gather path is capped at vocab <= 512")

    # ---- host-side algebraic fusion of the linear chain (tiny one-off matmuls) ----
    wr1 = wr @ w1                      # (Din, D)   reduce_dim then mlp[0] (no nonlinearity between)
    br1 = br @ w1 + b1                 # (1, D)
    tabw = emb_table @ wr1             # (V, D)     fold the frozen table through the fused linear
    w2p = w2 @ wp                      # (D, D)     mlp[2] hoisted past the pool, fused w/ predictor
    b2p = b2 @ wp                      # (1, D)

    # ---- lane-dense padding: D and V up to multiples of 128 (dense vst, full MXU lanes) ----
    Dp = _round_up(D, 128)
    Vp = _round_up(V, 128)
    pad2 = lambda a, r, c: jnp.pad(a, ((0, r - a.shape[0]), (0, c - a.shape[1])))
    compute = jnp.bfloat16 if use_bf16 else jnp.float32
    tabw_c = pad2(tabw, Vp, Dp).astype(compute)
    w2p_c = pad2(w2p, Dp, Dp).astype(compute)
    br1_p = pad2(br1, 1, Dp)
    b2p_p = pad2(b2p, 1, Dp)
    bp_p = pad2(bp, 1, Dp)

    # ---- batch tile: multiple of 8 sublanes; keep >= 2 grid steps when the batch can split
    #      so the "parallel" axis feeds both v7x TensorCores ----
    b8 = _round_up(B, 8)
    TB = _round_up(max(8, min(tb, b8)), 8)
    if b8 >= 16 and TB >= b8:
        TB = _round_up((B + 1) // 2, 8)
    Bp = _round_up(B, TB)
    pad_rows = Bp - B

    idx = x_idx.astype(jnp.int32)
    lens = sq_lengths.astype(jnp.float32)
    if pad_rows:
        idx = jnp.concatenate([idx, jnp.zeros((pad_rows, N), jnp.int32)], axis=0)
        lens = jnp.concatenate([lens, jnp.ones((pad_rows,), jnp.float32)], axis=0)
    idx_nm = jnp.transpose(idx)[:, :, None]     # (N, Bp, 1) slot-major slab
    lens = lens.reshape(Bp, 1)

    full = lambda a: pl.BlockSpec(a.shape, lambda i: (0,) * a.ndim)

    grid_spec = pltpu.PrefetchScalarGridSpec(
        num_scalar_prefetch=0,
        grid=(Bp // TB,),
        in_specs=[
            pl.BlockSpec((N, TB, 1), lambda i: (0, i, 0)),   # ids (slot-major tile)
            pl.BlockSpec((TB, 1), lambda i: (i, 0)),         # lengths
            full(tabw_c), full(br1_p), full(w2p_c), full(b2p_p), full(bp_p),
        ],
        out_specs=pl.BlockSpec((TB, Dp), lambda i: (i, 0)),
    )

    out = pl.pallas_call(
        functools.partial(_ffnn_kernel, fast=use_bf16),
        out_shape=jax.ShapeDtypeStruct((Bp, Dp), jnp.float32),
        grid_spec=grid_spec,
        compiler_params=pltpu.CompilerParams(
            dimension_semantics=("parallel",),               # shard batch tiles across cores
            vmem_limit_bytes=48 * 1024 * 1024),
    )(idx_nm, lens, tabw_c, br1_p, w2p_c, b2p_p, bp_p)
    return out[:B, :D]


def make_params(key, vocab, w_vec_dim, emb_dim):
    """Deterministic synthetic parameters (shapes match the nn.Module __init__)."""
    ks = jax.random.split(key, 9)
    # pretrained embedding table; row 0 is the padding row -> zeros
    emb_table = jax.random.normal(ks[0], (vocab, w_vec_dim), jnp.float32) * 0.1
    emb_table = emb_table.at[0].set(0.0)

    def linear(kw, kb, fan_in, fan_out):
        bound = 1.0 / np.sqrt(fan_in)
        w = jax.random.uniform(kw, (fan_in, fan_out), jnp.float32, -bound, bound)  # [in, out]
        b = jax.random.uniform(kb, (1, fan_out), jnp.float32, -bound, bound)
        return w, b

    wr, br = linear(ks[1], ks[2], w_vec_dim, emb_dim)   # reduce_dim
    w1, b1 = linear(ks[3], ks[4], emb_dim, emb_dim)     # mlp[0]
    w2, b2 = linear(ks[5], ks[6], emb_dim, emb_dim)     # mlp[2]
    wp, bp = linear(ks[7], ks[8], emb_dim, emb_dim)     # predictor
    return (emb_table, wr, br, w1, b1, w2, b2, wp, bp)


def reference_forward(x_idx, sq_lengths, params):
    """Pure-JAX reference mirroring the PyTorch forward (unfused)."""
    emb_table, wr, br, w1, b1, w2, b2, wp, bp = params
    x = emb_table[x_idx]
    x = x @ wr + br
    x = jnp.maximum(x @ w1 + b1, 0.0) @ w2 + b2
    pooled = jnp.sum(x, axis=1) / sq_lengths.reshape(-1, 1).astype(x.dtype)
    return pooled @ wp + bp


if __name__ == "__main__":
    # Small shapes implied by the forward: batch=2 recipes, n=8 ingredient slots,
    # wVecDim=32 (pretrained embedding dim), embDim=32, vocab=20.
    B, N, VOCAB, W_VEC_DIM, EMB_DIM = 2, 8, 20, 32, 32

    key = jax.random.PRNGKey(0)
    k_params, k_idx = jax.random.split(key)
    params = make_params(k_params, VOCAB, W_VEC_DIM, EMB_DIM)

    sq_lengths = jnp.array([5, 8], dtype=jnp.int32)          # true number of ingredients
    x_idx = jax.random.randint(k_idx, (B, N), 1, VOCAB, dtype=jnp.int32)
    pos = jnp.arange(N)[None, :]
    x_idx = jnp.where(pos < sq_lengths[:, None], x_idx, 0)   # zero-pad beyond true length

    y = jax.block_until_ready(ffnn_set_transformer_forward(x_idx, sq_lengths, params))
    y_ref = reference_forward(x_idx, sq_lengths, params)
    np.testing.assert_allclose(np.asarray(y), np.asarray(y_ref), rtol=1e-4, atol=1e-4)

    # Larger batch: exercises a multi-step batch-tiled grid (the TB cap forces >= 2 steps)
    # plus the bf16 MXU fast path (validated with loosened tolerance).
    B2 = 16
    k2a, k2b = jax.random.split(jax.random.PRNGKey(1))
    lens2 = jax.random.randint(k2a, (B2,), 1, N + 1, dtype=jnp.int32)
    idx2 = jax.random.randint(k2b, (B2, N), 1, VOCAB, dtype=jnp.int32)
    idx2 = jnp.where(jnp.arange(N)[None, :] < lens2[:, None], idx2, 0)
    y2_ref = reference_forward(idx2, lens2, params)

    y2 = jax.block_until_ready(
        ffnn_set_transformer_forward(idx2, lens2, params, use_bf16=False))   # default tb -> 2 steps
    np.testing.assert_allclose(np.asarray(y2), np.asarray(y2_ref), rtol=1e-4, atol=1e-4)

    y2_fast = jax.block_until_ready(
        ffnn_set_transformer_forward(idx2, lens2, params, tb=8, use_bf16=True))
    np.testing.assert_allclose(np.asarray(y2_fast), np.asarray(y2_ref), rtol=3e-2, atol=3e-2)

    print("KERNEL_OK")
</pallas_src>

<mosaic_0001>
module attributes {stable_mosaic.version = 11 : i64} {
  func.func @_ffnn_kernel(%arg0: i32, %arg1: memref<8x8x1xi32, #tpu.memory_space<vmem>>, %arg2: memref<8x1xf32, #tpu.memory_space<vmem>>, %arg3: memref<128x128xf32, #tpu.memory_space<vmem>>, %arg4: memref<1x128xf32, #tpu.memory_space<vmem>>, %arg5: memref<128x128xf32, #tpu.memory_space<vmem>>, %arg6: memref<1x128xf32, #tpu.memory_space<vmem>>, %arg7: memref<1x128xf32, #tpu.memory_space<vmem>>, %arg8: memref<8x128xf32, #tpu.memory_space<vmem>>) attributes {dimension_semantics = [#tpu.dimension_semantics<parallel>], iteration_bounds = array<i64: 1>, scalar_prefetch = 0 : i64, scratch_operands = 0 : i64, tpu.core_type = #tpu.core_type<tc>, window_params = [{transform_indices = @transform_0, window_bounds = array<i64: 8, 8, 1>}, {transform_indices = @transform_1, window_bounds = array<i64: 8, 1>}, {pipeline_mode = #tpu.pipeline_mode<synchronous>, transform_indices = @transform_2, window_bounds = array<i64: 128, 128>}, {pipeline_mode = #tpu.pipeline_mode<synchronous>, transform_indices = @transform_3, window_bounds = array<i64: 1, 128>}, {pipeline_mode = #tpu.pipeline_mode<synchronous>, transform_indices = @transform_4, window_bounds = array<i64: 128, 128>}, {pipeline_mode = #tpu.pipeline_mode<synchronous>, transform_indices = @transform_5, window_bounds = array<i64: 1, 128>}, {pipeline_mode = #tpu.pipeline_mode<synchronous>, transform_indices = @transform_6, window_bounds = array<i64: 1, 128>}, {transform_indices = @transform_7, window_bounds = array<i64: 8, 128>}]} {
    %0 = tpu.iota {dimensions = array<i32: 2>} : vector<8x8x128xi32>
    %c0 = arith.constant 0 : index
    %c0_0 = arith.constant 0 : index
    %c0_1 = arith.constant 0 : index
    %1 = vector.load %arg1[%c0, %c0_0, %c0_1] : memref<8x8x1xi32, #tpu.memory_space<vmem>>, vector<8x8x1xi32>
    %2 = vector.broadcast %1 : vector<8x8x1xi32> to vector<8x8x128xi32>
    %3 = arith.cmpi eq, %0, %2 : vector<8x8x128xi32>
    %4 = arith.extui %3 : vector<8x8x128xi1> to vector<8x8x128xi32>
    %5 = arith.sitofp %4 : vector<8x8x128xi32> to vector<8x8x128xf32>
    %6 = vector.shape_cast %5 : vector<8x8x128xf32> to vector<64x128xf32>
    %c0_2 = arith.constant 0 : index
    %c0_3 = arith.constant 0 : index
    %7 = vector.load %arg3[%c0_2, %c0_3] : memref<128x128xf32, #tpu.memory_space<vmem>>, vector<128x128xf32>
    %cst = arith.constant dense<0.000000e+00> : vector<64x128xf32>
    %8 = tpu.matmul %6, %7, %cst {dimension_numbers = #tpu.dot_dimension_numbers<[1], [0], [0], [1], [0, 0, 1, 1], [], []>} : vector<64x128xf32>, vector<128x128xf32>, vector<64x128xf32> -> vector<64x128xf32>
    %c0_4 = arith.constant 0 : index
    %c0_5 = arith.constant 0 : index
    %9 = vector.load %arg4[%c0_4, %c0_5] : memref<1x128xf32, #tpu.memory_space<vmem>>, vector<1x128xf32>
    %10 = vector.broadcast %9 : vector<1x128xf32> to vector<64x128xf32>
    %11 = arith.addf %8, %10 : vector<64x128xf32>
    %cst_6 = arith.constant 0.000000e+00 : f32
    %12 = vector.broadcast %cst_6 : f32 to vector<64x128xf32>
    %13 = arith.maximumf %11, %12 : vector<64x128xf32>
    %14 = vector.extract_strided_slice %13 {offsets = [0, 0], sizes = [8, 128], strides = [1, 1]} : vector<64x128xf32> to vector<8x128xf32>
    %15 = vector.extract_strided_slice %13 {offsets = [8, 0], sizes = [8, 128], strides = [1, 1]} : vector<64x128xf32> to vector<8x128xf32>
    %16 = arith.addf %14, %15 : vector<8x128xf32>
    %17 = vector.extract_strided_slice %13 {offsets = [16, 0], sizes = [8, 128], strides = [1, 1]} : vector<64x128xf32> to vector<8x128xf32>
    %18 = arith.addf %16, %17 : vector<8x128xf32>
    %19 = vector.extract_strided_slice %13 {offsets = [24, 0], sizes = [8, 128], strides = [1, 1]} : vector<64x128xf32> to vector<8x128xf32>
    %20 = arith.addf %18, %19 : vector<8x128xf32>
    %21 = vector.extract_strided_slice %13 {offsets = [32, 0], sizes = [8, 128], strides = [1, 1]} : vector<64x128xf32> to vector<8x128xf32>
    %22 = arith.addf %20, %21 : vector<8x128xf32>
    %23 = vector.extract_strided_slice %13 {offsets = [40, 0], sizes = [8, 128], strides = [1, 1]} : vector<64x128xf32> to vector<8x128xf32>
    %24 = arith.addf %22, %23 : vector<8x128xf32>
    %25 = vector.extract_strided_slice %13 {offsets = [48, 0], sizes = [8, 128], strides = [1, 1]} : vector<64x128xf32> to vector<8x128xf32>
    %26 = arith.addf %24, %25 : vector<8x128xf32>
    %27 = vector.extract_strided_slice %13 {offsets = [56, 0], sizes = [8, 128], strides = [1, 1]} : vector<64x128xf32> to vector<8x128xf32>
    %28 = arith.addf %26, %27 : vector<8x128xf32>
    %c0_7 = arith.constant 0 : index
    %c0_8 = arith.constant 0 : index
    %29 = vector.load %arg2[%c0_7, %c0_8] : memref<8x1xf32, #tpu.memory_space<vmem>>, vector<8x1xf32>
    %cst_9 = arith.constant 1.000000e+00 : f32
    %30 = vector.broadcast %cst_9 : f32 to vector<8x1xf32>
    %31 = arith.divf %30, %29 : vector<8x1xf32>
    %32 = vector.broadcast %31 : vector<8x1xf32> to vector<8x128xf32>
    %33 = arith.mulf %28, %32 : vector<8x128xf32>
    %c0_10 = arith.constant 0 : index
    %c0_11 = arith.constant 0 : index
    %34 = vector.load %arg5[%c0_10, %c0_11] : memref<128x128xf32, #tpu.memory_space<vmem>>, vector<128x128xf32>
    %cst_12 = arith.constant dense<0.000000e+00> : vector<8x128xf32>
    %35 = tpu.matmul %33, %34, %cst_12 {dimension_numbers = #tpu.dot_dimension_numbers<[1], [0], [0], [1], [0, 0, 1, 1], [], []>} : vector<8x128xf32>, vector<128x128xf32>, vector<8x128xf32> -> vector<8x128xf32>
    %cst_13 = arith.constant 8.000000e+00 : f32
    %36 = vector.broadcast %cst_13 : f32 to vector<8x1xf32>
    %37 = arith.mulf %36, %31 : vector<8x1xf32>
    %c0_14 = arith.constant 0 : index
    %c0_15 = arith.constant 0 : index
    %38 = vector.load %arg6[%c0_14, %c0_15] : memref<1x128xf32, #tpu.memory_space<vmem>>, vector<1x128xf32>
    %39 = vector.broadcast %37 : vector<8x1xf32> to vector<8x128xf32>
    %40 = vector.broadcast %38 : vector<1x128xf32> to vector<8x128xf32>
    %41 = arith.mulf %39, %40 : vector<8x128xf32>
    %42 = arith.addf %35, %41 : vector<8x128xf32>
    %c0_16 = arith.constant 0 : index
    %c0_17 = arith.constant 0 : index
    %43 = vector.load %arg7[%c0_16, %c0_17] : memref<1x128xf32, #tpu.memory_space<vmem>>, vector<1x128xf32>
    %44 = vector.broadcast %43 : vector<1x128xf32> to vector<8x128xf32>
    %45 = arith.addf %42, %44 : vector<8x128xf32>
    %c0_18 = arith.constant 0 : index
    %c0_19 = arith.constant 0 : index
    %46 = vector.load %arg8[%c0_18, %c0_19] : memref<8x128xf32, #tpu.memory_space<vmem>>, vector<8x128xf32>
    tpu.vector_store %arg8[%c0_18, %c0_19], %45 {strides = array<i32>} : memref<8x128xf32, #tpu.memory_space<vmem>>, vector<8x128xf32>,
    return
  }
  func.func @transform_0(%arg0: i32) -> (i32, i32, i32) {
    %c0_i32 = arith.constant 0 : i32
    %c0_i32_0 = arith.constant 0 : i32
    %c0_i32_1 = arith.constant 0 : i32
    return %c0_i32, %arg0, %c0_i32_0 : i32, i32, i32
  }
  func.func @transform_1(%arg0: i32) -> (i32, i32) {
    %c0_i32 = arith.constant 0 : i32
    %c0_i32_0 = arith.constant 0 : i32
    return %arg0, %c0_i32 : i32, i32
  }
  func.func @transform_2(%arg0: i32) -> (i32, i32) {
    %c0_i32 = arith.constant 0 : i32
    %c0_i32_0 = arith.constant 0 : i32
    %c0_i32_1 = arith.constant 0 : i32
    return %c0_i32, %c0_i32_0 : i32, i32
  }
  func.func @transform_3(%arg0: i32) -> (i32, i32) {
    %c0_i32 = arith.constant 0 : i32
    %c0_i32_0 = arith.constant 0 : i32
    %c0_i32_1 = arith.constant 0 : i32
    return %c0_i32, %c0_i32_0 : i32, i32
  }
  func.func @transform_4(%arg0: i32) -> (i32, i32) {
    %c0_i32 = arith.constant 0 : i32
    %c0_i32_0 = arith.constant 0 : i32
    %c0_i32_1 = arith.constant 0 : i32
    return %c0_i32, %c0_i32_0 : i32, i32
  }
  func.func @transform_5(%arg0: i32) -> (i32, i32) {
    %c0_i32 = arith.constant 0 : i32
    %c0_i32_0 = arith.constant 0 : i32
    %c0_i32_1 = arith.constant 0 : i32
    return %c0_i32, %c0_i32_0 : i32, i32
  }
  func.func @transform_6(%arg0: i32) -> (i32, i32) {
    %c0_i32 = arith.constant 0 : i32
    %c0_i32_0 = arith.constant 0 : i32
    %c0_i32_1 = arith.constant 0 : i32
    return %c0_i32, %c0_i32_0 : i32, i32
  }
  func.func @transform_7(%arg0: i32) -> (i32, i32) {
    %c0_i32 = arith.constant 0 : i32
    %c0_i32_0 = arith.constant 0 : i32
    return %arg0, %c0_i32 : i32, i32
  }
}

</mosaic_0001>

<llo_original>
// kernel: tpu_custom_call.1
$region0: #{tpu_custom_call.1}
  #allocation0 [shape = 'u32[]', space=smem, size = 0x4, offset = 0x4, fixed_abs, tag = 'smem constant byte address 0x4 - core index']
  #allocation1 [shape = 'u32[72,128]{1,0:T(1,128)}', space=vmem, size = 0x9000, scoped, tag = 'internal scratch']
  %s0 = inlined_call_operand.vmem [shape: s32[8,8,1], index: 0, kind: input, shape index: {}]
  %s1 = inlined_call_operand.vmem [shape: f32[8,1], index: 1, kind: input, shape index: {}]
  %s2 = inlined_call_operand.hbm [shape: f32[128,128], index: 2, kind: input, shape index: {}]
  %s3 = inlined_call_operand.vmem [shape: f32[1,128], index: 3, kind: input, shape index: {}]
  %s4 = inlined_call_operand.hbm [shape: f32[128,128], index: 4, kind: input, shape index: {}]
  %s5 = inlined_call_operand.vmem [shape: f32[1,128], index: 5, kind: input, shape index: {}]
  %s6 = inlined_call_operand.vmem [shape: f32[1,128], index: 6, kind: input, shape index: {}]
  %s7 = inlined_call_operand.hbm [shape: f32[8,128], index: 7, kind: output, shape index: {}]
  %s8 = sld [smem:[#allocation0]]
  $region46: #{tpu_custom_call.1} parent=0
    _
  %s10 = ssub.s32 1, %s8
  %s11 = scalar_select 0, %s10, %s8
  $region1: #{tpu_custom_call.1} parent=0
    #allocation2 [shape = 'u8[65536]{0}', space=vmem, size = 0x10000, scoped, tag = 'input window, operand 2, single buffered']
    #allocation3 [shape = 's32[1]{0}', space=sflag, size = 0x4, scoped, tag = 'scoped memory for tpu_custom_call.1']
    #allocation4 [shape = 's32[1]{0}', space=sflag, size = 0x4, scoped, tag = 'scoped memory for tpu_custom_call.1']
    #allocation5 [shape = 'u8[65536]{0}', space=vmem, size = 0x10000, scoped, tag = 'input window, operand 4, single buffered']
    #allocation6 [shape = 's32[1]{0}', space=sflag, size = 0x4, scoped, tag = 'scoped memory for tpu_custom_call.1']
    #allocation7 [shape = 'u8[4096]{0}', space=vmem, size = 0x1000, scoped, tag = 'output window, operand 0, single buffered']
    %12 = vsyncpa [#allocation3], 0
    %13 = vsyncpa [#allocation6], 0
    %14 = vsyncpa [#allocation4], 0
    // Predicated region
    $region2: #{tpu_custom_call.1} parent=1 // pred_check
      _
    $region3: #{tpu_custom_call.1} parent=1 // pred_check_branch
      %16 = sbr.rel (0) target = $region5
    $region4: #{tpu_custom_call.1} parent=1 // pred_region
      _
    $region5: #{tpu_custom_call.1} parent=1 // pred_fallthru
      _
    // Predicated region
    $region6: #{tpu_custom_call.1} parent=1 // pred_check
      _
    $region7: #{tpu_custom_call.1} parent=1 // pred_check_branch
      %18 = sbr.rel (0) target = $region9
    $region8: #{tpu_custom_call.1} parent=1 // pred_region
      _
    $region9: #{tpu_custom_call.1} parent=1 // pred_fallthru
      _
    // Predicated region
    $region10: #{tpu_custom_call.1} parent=1 // pred_check
      _
    $region11: #{tpu_custom_call.1} parent=1 // pred_check_branch
      %20 = sbr.rel (0) target = $region13
    $region12: #{tpu_custom_call.1} parent=1 // pred_region
      %22 = vsyncadd [#allocation3], 0
      %s23 = sshll.u32 %s2, 4
      %s24 = int_to_ptr.hbm [resolvable:$true] %s23
      %s25 = sshll.u32 [#allocation2], 4
      %s26 = int_to_ptr.vmem [resolvable:$true] %s25
      %31 = dma.hbm_to_vmem [thread:$0]  %s24, 2048, %s26, [#allocation3], 128, 128, 8
    $region13: #{tpu_custom_call.1} parent=1 // pred_fallthru
      _
    // Predicated region
    $region14: #{tpu_custom_call.1} parent=1 // pred_check
      _
    $region15: #{tpu_custom_call.1} parent=1 // pred_check_branch
      %33 = sbr.rel (0) target = $region17
    $region16: #{tpu_custom_call.1} parent=1 // pred_region
      _
    $region17: #{tpu_custom_call.1} parent=1 // pred_fallthru
      _
    // Predicated region
    $region18: #{tpu_custom_call.1} parent=1 // pred_check
      _
    $region19: #{tpu_custom_call.1} parent=1 // pred_check_branch
      %35 = sbr.rel (0) target = $region21
    $region20: #{tpu_custom_call.1} parent=1 // pred_region
      %37 = vsyncadd [#allocation6], 0
      %s38 = sshll.u32 %s4, 4
      %s39 = int_to_ptr.hbm [resolvable:$true] %s38
      %s40 = sshll.u32 [#allocation5], 4
      %s41 = int_to_ptr.vmem [resolvable:$true] %s40
      %46 = dma.hbm_to_vmem [thread:$0]  %s39, 2048, %s41, [#allocation6], 128, 128, 8
    $region21: #{tpu_custom_call.1} parent=1 // pred_fallthru
      _
    // Predicated region
    $region22: #{tpu_custom_call.1} parent=1 // pred_check
      _
    $region23: #{tpu_custom_call.1} parent=1 // pred_check_branch
      %48 = sbr.rel (0) target = $region25
    $region24: #{tpu_custom_call.1} parent=1 // pred_region
      _
    $region25: #{tpu_custom_call.1} parent=1 // pred_fallthru
      _
    // Predicated region
    $region26: #{tpu_custom_call.1} parent=1 // pred_check
      _
    $region27: #{tpu_custom_call.1} parent=1 // pred_check_branch
      %50 = sbr.rel (0) target = $region29
    $region28: #{tpu_custom_call.1} parent=1 // pred_region
      _
    $region29: #{tpu_custom_call.1} parent=1 // pred_fallthru
      _
    // Predicated region
    $region30: #{tpu_custom_call.1} parent=1 // pred_check
      _
    $region31: #{tpu_custom_call.1} parent=1 // pred_check_branch
      %52 = sbr.rel (0) target = $region33
    $region32: #{tpu_custom_call.1} parent=1 // pred_region
      %54 = dma.done [#allocation3], 2048
    $region33: #{tpu_custom_call.1} parent=1 // pred_fallthru
      _
    // Predicated region
    $region34: #{tpu_custom_call.1} parent=1 // pred_check
      _
    $region35: #{tpu_custom_call.1} parent=1 // pred_check_branch
      %56 = sbr.rel (0) target = $region37
    $region36: #{tpu_custom_call.1} parent=1 // pred_region
      %58 = dma.done [#allocation6], 2048
    $region37: #{tpu_custom_call.1} parent=1 // pred_fallthru
      _
    %v59 = vlaneseq
    %v60 = vand.u32 %v59, 127
    %v61 = vld [vmem:[%s0] sm:$0xff]
    %v62 = vld [vmem:[%s0 + $0x8] sm:$0xff]
    %v63 = vld [vmem:[%s0 + $0x10] sm:$0xff]
    %v64 = vld [vmem:[%s0 + $0x18] sm:$0xff]
    %v65 = vld [vmem:[%s0 + $0x20] sm:$0xff]
    %v66 = vld [vmem:[%s0 + $0x28] sm:$0xff]
    %v67 = vld [vmem:[%s0 + $0x30] sm:$0xff]
    %v68 = vld [vmem:[%s0 + $0x38] sm:$0xff]
    %69 = vset.pattern.permute.xlu0 0
    %70 = vperm.xlu0 %69, %v61
    %v71 = vpop.permute.xlu0 %70
    %72 = vset.pattern.permute.xlu0 0
    %73 = vperm.xlu0 %72, %v62
    %v74 = vpop.permute.xlu0 %73
    %75 = vset.pattern.permute.xlu0 0
    %76 = vperm.xlu0 %75, %v63
    %v77 = vpop.permute.xlu0 %76
    %78 = vset.pattern.permute.xlu0 0
    %79 = vperm.xlu0 %78, %v64
    %v80 = vpop.permute.xlu0 %79
    %81 = vset.pattern.permute.xlu0 0
    %82 = vperm.xlu0 %81, %v65
    %v83 = vpop.permute.xlu0 %82
    %84 = vset.pattern.permute.xlu0 0
    %85 = vperm.xlu0 %84, %v66
    %v86 = vpop.permute.xlu0 %85
    %87 = vset.pattern.permute.xlu0 0
    %88 = vperm.xlu0 %87, %v67
    %v89 = vpop.permute.xlu0 %88
    %90 = vset.pattern.permute.xlu0 0
    %91 = vperm.xlu0 %90, %v68
    %v92 = vpop.permute.xlu0 %91
    %vm93 = vcmp.eq.s32.totalorder %v60, %v71
    %vm94 = vcmp.eq.s32.totalorder %v60, %v74
    %vm95 = vcmp.eq.s32.totalorder %v60, %v77
    %vm96 = vcmp.eq.s32.totalorder %v60, %v80
    %vm97 = vcmp.eq.s32.totalorder %v60, %v83
    %vm98 = vcmp.eq.s32.totalorder %v60, %v86
    %vm99 = vcmp.eq.s32.totalorder %v60, %v89
    %vm100 = vcmp.eq.s32.totalorder %v60, %v92
    %v101 = vsel %vm93, 1, 0
    %v102 = vsel %vm94, 1, 0
    %v103 = vsel %vm95, 1, 0
    %v104 = vsel %vm96, 1, 0
    %v105 = vsel %vm97, 1, 0
    %v106 = vsel %vm98, 1, 0
    %v107 = vsel %vm99, 1, 0
    %v108 = vsel %vm100, 1, 0
    %v109 = vcvt.s32.f32 %v101
    %v110 = vcvt.s32.f32 %v102
    %v111 = vcvt.s32.f32 %v103
    %v112 = vcvt.s32.f32 %v104
    %v113 = vcvt.s32.f32 %v105
    %v114 = vcvt.s32.f32 %v106
    %v115 = vcvt.s32.f32 %v107
    %v116 = vcvt.s32.f32 %v108
    %v117 = vld [vmem:[#allocation2] sm:$0xff]
    %v118 = vld [vmem:[#allocation2 + $0x8] sm:$0xff]
    %v119 = vld [vmem:[#allocation2 + $0x10] sm:$0xff]
    %v120 = vld [vmem:[#allocation2 + $0x18] sm:$0xff]
    %v121 = vld [vmem:[#allocation2 + $0x20] sm:$0xff]
    %v122 = vld [vmem:[#allocation2 + $0x28] sm:$0xff]
    %v123 = vld [vmem:[#allocation2 + $0x30] sm:$0xff]
    %v124 = vld [vmem:[#allocation2 + $0x38] sm:$0xff]
    %v125 = vld [vmem:[#allocation2 + $0x40] sm:$0xff]
    %v126 = vld [vmem:[#allocation2 + $0x48] sm:$0xff]
    %v127 = vld [vmem:[#allocation2 + $0x50] sm:$0xff]
    %v128 = vld [vmem:[#allocation2 + $0x58] sm:$0xff]
    %v129 = vld [vmem:[#allocation2 + $0x60] sm:$0xff]
    %v130 = vld [vmem:[#allocation2 + $0x68] sm:$0xff]
    %v131 = vld [vmem:[#allocation2 + $0x70] sm:$0xff]
    %v132 = vld [vmem:[#allocation2 + $0x78] sm:$0xff]
    %v133 = vld [vmem:[%s3] sm:$0x1]
    %v135 = vperm.slane %v133, 0
    %137 = vmatpush.msra.mxu0 %v132
    %138 = vmatpush.msra.mxu0 %v131
    %139 = vmatpush.msra.mxu0 %v130
    %140 = vmatpush.msra.mxu0 %v129
    %141 = vmatpush.msra.mxu0 %v128
    %142 = vmatpush.msra.mxu0 %v127
    %143 = vmatpush.msra.mxu0 %v126
    %144 = vmatpush.msra.mxu0 %v125
    %145 = vmatpush.msra.mxu0 %v124
    %146 = vmatpush.msra.mxu0 %v123
    %147 = vmatpush.msra.mxu0 %v122
    %148 = vmatpush.msra.mxu0 %v121
    %149 = vmatpush.msra.mxu0 %v120
    %150 = vmatpush.msra.mxu0 %v119
    %151 = vmatpush.msra.mxu0 %v118
    %152 = vmatpush.msra.mxu0 %v117
    %153 = vmatmul.f32.gmra.mxu0 %v109
    %v154 = vpop.f32.mrf.mxu0
    %v155 = vadd.f32 %v135, %v154
    %156 = vmatmul.f32.gmra.mxu0 %v110
    %v157 = vpop.f32.mrf.mxu0
    %v158 = vadd.f32 %v135, %v157
    %159 = vmatmul.f32.gmra.mxu0 %v111
    %v160 = vpop.f32.mrf.mxu0
    %v161 = vadd.f32 %v135, %v160
    %162 = vmatmul.f32.gmra.mxu0 %v112
    %v163 = vpop.f32.mrf.mxu0
    %v164 = vadd.f32 %v135, %v163
    %165 = vmatmul.f32.gmra.mxu0 %v113
    %v166 = vpop.f32.mrf.mxu0
    %v167 = vadd.f32 %v135, %v166
    %168 = vmatmul.f32.gmra.mxu0 %v114
    %v169 = vpop.f32.mrf.mxu0
    %v170 = vadd.f32 %v135, %v169
    %171 = vmatmul.f32.gmra.mxu0 %v115
    %v172 = vpop.f32.mrf.mxu0
    %v173 = vadd.f32 %v135, %v172
    %174 = vmatmul.f32.gmra.mxu0 %v116
    %v175 = vpop.f32.mrf.mxu0
    %v176 = vadd.f32 %v135, %v175
    %177 = vdwg.mxu0
    %v178 = vmax.f32 %v155, 0.0
    %v179 = vmax.f32 %v158, 0.0
    %v180 = vmax.f32 %v161, 0.0
    %v181 = vmax.f32 %v164, 0.0
    %v182 = vmax.f32 %v167, 0.0
    %v183 = vmax.f32 %v170, 0.0
    %v184 = vmax.f32 %v173, 0.0
    %v185 = vmax.f32 %v176, 0.0
    %v186 = vadd.f32 %v178, %v179
    %v187 = vadd.f32 %v186, %v180
    %v188 = vadd.f32 %v187, %v181
    %v189 = vadd.f32 %v188, %v182
    %v190 = vadd.f32 %v189, %v183
    %v191 = vadd.f32 %v190, %v184
    %v192 = vadd.f32 %v191, %v185
    %v193 = vld [vmem:[%s1] sm:$0xff]
    %v194 = vrcp.pop %v193
    %v195 = vmul.f32 %v193, %v194
    %v196 = vsub.f32 1.0, %v195
    %v197 = vmul.f32 %v194, %v196
    %v198 = vadd.f32 %v194, %v197
    %vm199 = vweird.f32 %v193
    %vm200 = vweird.f32 %v194
    %vm201 = vmor %vm199, %vm200
    %v202 = vsel %vm201, %v194, %v198
    %v203 = vand.u32 2147483647, %v193
    %vm204 = vcmp.eq.f32.partialorder %v203, 8.507059e+37
    %v205 = vand.u32 %v193, 2147483648
    %v206 = vor.u32 1.1754944e-38, %v205
    %v207 = vsel %vm204, %v206, %v202
    %v208 = vmul.f32 1.0, %v207
    %210 = vset.pattern.permute.xlu0 0
    %211 = vperm.xlu0 %210, %v208
    %v212 = vpop.permute.xlu0 %211
    %v214 = vmul.f32 %v192, %v212
    %v215 = vld [vmem:[#allocation5] sm:$0xff]
    %v216 = vld [vmem:[#allocation5 + $0x8] sm:$0xff]
    %v217 = vld [vmem:[#allocation5 + $0x10] sm:$0xff]
    %v218 = vld [vmem:[#allocation5 + $0x18] sm:$0xff]
    %v219 = vld [vmem:[#allocation5 + $0x20] sm:$0xff]
    %v220 = vld [vmem:[#allocation5 + $0x28] sm:$0xff]
    %v221 = vld [vmem:[#allocation5 + $0x30] sm:$0xff]
    %v222 = vld [vmem:[#allocation5 + $0x38] sm:$0xff]
    %v223 = vld [vmem:[#allocation5 + $0x40] sm:$0xff]
    %v224 = vld [vmem:[#allocation5 + $0x48] sm:$0xff]
    %v225 = vld [vmem:[#allocation5 + $0x50] sm:$0xff]
    %v226 = vld [vmem:[#allocation5 + $0x58] sm:$0xff]
    %v227 = vld [vmem:[#allocation5 + $0x60] sm:$0xff]
    %v228 = vld [vmem:[#allocation5 + $0x68] sm:$0xff]
    %v229 = vld [vmem:[#allocation5 + $0x70] sm:$0xff]
    %v230 = vld [vmem:[#allocation5 + $0x78] sm:$0xff]
    %v231 = vmul.f32 %v208, 8.0
    %v232 = vld [vmem:[%s5] sm:$0x1]
    %234 = vset.pattern.permute.xlu0 0
    %235 = vperm.xlu0 %234, %v231
    %v236 = vpop.permute.xlu0 %235
    %v239 = vperm.slane %v232, 0
    %v241 = vmul.f32 %v236, %v239
    %242 = vmatpush.msra.mxu0 %v230
    %243 = vmatpush.msra.mxu0 %v229
    %244 = vmatpush.msra.mxu0 %v228
    %245 = vmatpush.msra.mxu0 %v227
    %246 = vmatpush.msra.mxu0 %v226
    %247 = vmatpush.msra.mxu0 %v225
    %248 = vmatpush.msra.mxu0 %v224
    %249 = vmatpush.msra.mxu0 %v223
    %250 = vmatpush.msra.mxu0 %v222
    %251 = vmatpush.msra.mxu0 %v221
    %252 = vmatpush.msra.mxu0 %v220
    %253 = vmatpush.msra.mxu0 %v219
    %254 = vmatpush.msra.mxu0 %v218
    %255 = vmatpush.msra.mxu0 %v217
    %256 = vmatpush.msra.mxu0 %v216
    %257 = vmatpush.msra.mxu0 %v215
    %258 = vmatmul.f32.gmra.mxu0 %v214
    %v259 = vpop.f32.mrf.mxu0
    %v260 = vadd.f32 %v241, %v259
    %261 = vdwg.mxu0
    %v262 = vld [vmem:[%s6] sm:$0x1]
    %v264 = vperm.slane %v262, 0
    %v266 = vadd.f32 %v260, %v264
    %267 = vst [vmem:[#allocation7] sm:$0xff] %v266
    // Predicated region
    $region38: #{tpu_custom_call.1} parent=1 // pred_check
      _
    $region39: #{tpu_custom_call.1} parent=1 // pred_check_branch
      %269 = sbr.rel (0) target = $region41
    $region40: #{tpu_custom_call.1} parent=1 // pred_region
      %271 = vsyncadd [#allocation4], 0
      %s273 = sshll.u32 [#allocation7], 4
      %s274 = int_to_ptr.vmem [resolvable:$true] %s273
      %s275 = sshll.u32 %s7, 4
      %s276 = int_to_ptr.hbm [resolvable:$true] %s275
      %278 = dma.vmem_to_hbm [thread:$0]  %s274, 128, %s276, [#allocation4]
    $region41: #{tpu_custom_call.1} parent=1 // pred_fallthru
      _
    // Predicated region
    $region42: #{tpu_custom_call.1} parent=1 // pred_check
      _
    $region43: #{tpu_custom_call.1} parent=1 // pred_check_branch
      %280 = sbr.rel (0) target = $region45
    $region44: #{tpu_custom_call.1} parent=1 // pred_region
      %282 = dma.done [#allocation4], 128
    $region45: #{tpu_custom_call.1} parent=1 // pred_fallthru
      _
    %283 = vsyncpa [#allocation3], 1
    %284 = vsyncpa [#allocation6], 1
    %285 = vsyncpa [#allocation4], 1

</llo_original>
